<compile_context>
chip_gen: v5e
topology: v5e:2x2
jax: 0.10.0
libtpu: 0.0.40
codegen_flags: <defaults>
</compile_context>

<pallas_src>
import functools
import math

import jax
import jax.numpy as jnp
from jax.experimental import pallas as pl
from jax.experimental.pallas import tpu as pltpu


# ------------------------------ tiling helpers ------------------------------

def _pick_tile(dim: int, target: int, align: int) -> int:
    """Largest tile <= target that is a multiple of `align` and divides `dim`;
    falls back to the full dimension (always a legal BlockSpec block)."""
    if dim <= target:
        return dim
    t = (target // align) * align
    while t >= align:
        if dim % t == 0:
            return t
        t -= align
    return dim


def _pick_head_block(h: int, d_k: int) -> int:
    """Heads per attention block: smallest Hb dividing h with Hb*d_k a multiple
    of 128 (lane-dense blocks/stores); falls back to all heads (full-D block)."""
    if d_k % 128 == 0:
        return 1
    for hb in range(1, h):
        if h % hb == 0 and (hb * d_k) % 128 == 0:
            return hb
    return h


_VMEM_LIMIT = 32 * 1024 * 1024  # safe on v5e/v6e (128 MiB) and v7x (64 MiB)


# ------------------------- tiled linear (x @ W + b) --------------------------

def _linear_kernel(x_ref, w_ref, b_ref, o_ref, acc_ref):
    @pl.when(pl.program_id(2) == 0)
    def _():
        acc_ref[...] = jnp.zeros_like(acc_ref)

    acc_ref[...] += jnp.dot(x_ref[...], w_ref[...],
                            preferred_element_type=jnp.float32)

    @pl.when(pl.program_id(2) == pl.num_programs(2) - 1)
    def _():
        o_ref[...] = (acc_ref[...] + b_ref[...].astype(jnp.float32)).astype(o_ref.dtype)


def linear(x2d, w, b, *, tm_target=256, tn_target=256, tk_target=512):
    """x2d: (M, K) @ w: (K, N) + b: (N,) -> (M, N), tiled + pipelined."""
    m, kdim = x2d.shape
    n = w.shape[1]
    tm = _pick_tile(m, tm_target, 8)
    tn = _pick_tile(n, tn_target, 128)
    tk = _pick_tile(kdim, tk_target, 128)
    grid = (m // tm, n // tn, kdim // tk)
    return pl.pallas_call(
        _linear_kernel,
        out_shape=jax.ShapeDtypeStruct((m, n), x2d.dtype),
        grid=grid,
        in_specs=[
            pl.BlockSpec((tm, tk), lambda i, j, k: (i, k)),
            pl.BlockSpec((tk, tn), lambda i, j, k: (k, j)),
            pl.BlockSpec((1, tn), lambda i, j, k: (0, j)),
        ],
        out_specs=pl.BlockSpec((tm, tn), lambda i, j, k: (i, j)),
        scratch_shapes=[pltpu.VMEM((tm, tn), jnp.float32)],
        compiler_params=pltpu.CompilerParams(
            dimension_semantics=("parallel", "parallel", "arbitrary"),
            vmem_limit_bytes=_VMEM_LIMIT,
        ),
        cost_estimate=pl.CostEstimate(
            flops=2 * m * n * kdim,
            transcendentals=0,
            bytes_accessed=4 * (m * kdim + kdim * n + m * n),
        ),
    )(x2d, w, b.reshape(1, n))


# ------------------ flash attention with fused head split -------------------

def _attn_flash_kernel(q_ref, k_ref, v_ref, o_ref, m_sc, l_sc, acc_sc,
                       *, scale, hb, dk):
    """One (batch, head-block, q-block) tile, iterated over kv-blocks (axis 3).

    q_ref: (1, tq, hb*dk)   k_ref/v_ref: (1, tkv, hb*dk)   o_ref: (1, tq, hb*dk)
    Scratch: m_sc/l_sc (hb, tq, 1), acc_sc (hb, tq, dk) persist across kv steps.
    """
    kv = pl.program_id(3)

    @pl.when(kv == 0)
    def _():
        m_sc[...] = jnp.full_like(m_sc, -jnp.inf)
        l_sc[...] = jnp.zeros_like(l_sc)
        acc_sc[...] = jnp.zeros_like(acc_sc)

    # Scale folded into Q (tq*dk multiplies instead of tq*tkv on the scores).
    q = q_ref[0].astype(jnp.float32) * scale        # (tq, hb*dk)
    k = k_ref[0].astype(jnp.float32)                # (tkv, hb*dk)
    v = v_ref[0].astype(jnp.float32)                # (tkv, hb*dk)

    # Static unroll over the heads packed into this block's lane dimension.
    for hh in range(hb):
        sl = slice(hh * dk, (hh + 1) * dk)
        qh, kh, vh = q[:, sl], k[:, sl], v[:, sl]
        # q @ k^T via dot_general contracting the last dims (no explicit .T).
        s = jax.lax.dot_general(qh, kh, (((1,), (1,)), ((), ())),
                                preferred_element_type=jnp.float32)   # (tq, tkv)
        # TODO(synk): mask intentionally not applied (reference masked_fill result is discarded).
        m_prev = m_sc[hh]                                             # (tq, 1)
        m_new = jnp.maximum(m_prev, jnp.max(s, axis=-1, keepdims=True))
        alpha = jnp.exp(m_prev - m_new)
        p = jnp.exp(s - m_new)
        l_sc[hh] = alpha * l_sc[hh] + jnp.sum(p, axis=-1, keepdims=True)
        acc_sc[hh] = alpha * acc_sc[hh] + jnp.dot(p, vh,
                                                  preferred_element_type=jnp.float32)
        m_sc[hh] = m_new

    @pl.when(kv == pl.num_programs(3) - 1)
    def _():
        outs = []
        for hh in range(hb):
            # approx reciprocal runs on the otherwise-idle EUP slot.
            outs.append(acc_sc[hh] * pl.reciprocal(l_sc[hh], approx=True))
        # Single lane-dense store (width hb*dk >= 128 or == d_model).
        o_ref[0] = jnp.concatenate(outs, axis=-1).astype(o_ref.dtype)


def mha_attention(query, key, value, scale, h, d_k, *,
                  tq_target=256, tkv_target=256):
    """query/key/value/out: (B, S, D) with D = h*d_k. Head split/merge is done
    purely via BlockSpec indexing along D (no HBM transposes)."""
    B, S, D = query.shape
    hb = _pick_head_block(h, d_k)
    hw = hb * d_k                       # lane width of one head-block
    tq = _pick_tile(S, tq_target, 8)
    tkv = _pick_tile(S, tkv_target, 8)
    grid = (B, h // hb, S // tq, S // tkv)

    kern = functools.partial(_attn_flash_kernel, scale=scale, hb=hb, dk=d_k)
    q_spec = pl.BlockSpec((1, tq, hw), lambda b, g, qi, ki: (b, qi, g))
    kv_spec = pl.BlockSpec((1, tkv, hw), lambda b, g, qi, ki: (b, ki, g))
    o_spec = pl.BlockSpec((1, tq, hw), lambda b, g, qi, ki: (b, qi, g))

    return pl.pallas_call(
        kern,
        out_shape=jax.ShapeDtypeStruct((B, S, D), query.dtype),
        grid=grid,
        in_specs=[q_spec, kv_spec, kv_spec],
        out_specs=o_spec,
        scratch_shapes=[
            pltpu.VMEM((hb, tq, 1), jnp.float32),    # running max m
            pltpu.VMEM((hb, tq, 1), jnp.float32),    # running sum l
            pltpu.VMEM((hb, tq, d_k), jnp.float32),  # output accumulator
        ],
        compiler_params=pltpu.CompilerParams(
            dimension_semantics=("parallel", "parallel", "parallel", "arbitrary"),
            vmem_limit_bytes=_VMEM_LIMIT,
        ),
        cost_estimate=pl.CostEstimate(
            flops=4 * B * h * S * S * d_k,
            transcendentals=B * h * S * S,
            bytes_accessed=4 * (4 * B * S * D),
        ),
    )(query, key, value)


# ----------------------------- module wrapper --------------------------------

class MultiHeadAttentionPallas:
    def __init__(self, d_model: int, h: int, dropout: float, key):
        assert d_model % h == 0, "d_model not divisible by h"
        self.d_model = d_model
        self.h = h
        self.d_k = d_model // h
        self.dropout = dropout  # identity when 0.0
        ks = jax.random.split(key, 8)
        bound = 1.0 / math.sqrt(d_model)

        def uinit(k, shape):
            return jax.random.uniform(k, shape, jnp.float32, -bound, bound)

        # Weights stored as (in, out) so y = x @ W + b.
        self.Wq, self.bq = uinit(ks[0], (d_model, d_model)), uinit(ks[1], (d_model,))
        self.Wk, self.bk = uinit(ks[2], (d_model, d_model)), uinit(ks[3], (d_model,))
        self.Wv, self.bv = uinit(ks[4], (d_model, d_model)), uinit(ks[5], (d_model,))
        self.Wo, self.bo = uinit(ks[6], (d_model, d_model)), uinit(ks[7], (d_model,))
        # Fused QKV weights for the self-attention fast path (read activation once).
        self.W_qkv = jnp.concatenate([self.Wq, self.Wk, self.Wv], axis=1)
        self.b_qkv = jnp.concatenate([self.bq, self.bk, self.bv], axis=0)

    def __call__(self, q, k, v, mask=None):
        # NOTE: mask is accepted but (faithfully to the reference, whose
        # masked_fill result is discarded) has no effect on the output.
        B, S, D = q.shape

        if (q is k) and (k is v):
            # Self-attention: one fused (D, 3D) projection.
            qkv = linear(q.reshape(B * S, D), self.W_qkv, self.b_qkv)
            query = qkv[:, :D].reshape(B, S, D)
            key_ = qkv[:, D:2 * D].reshape(B, S, D)
            value = qkv[:, 2 * D:].reshape(B, S, D)
        else:
            query = linear(q.reshape(B * S, D), self.Wq, self.bq).reshape(B, S, D)
            key_ = linear(k.reshape(B * S, D), self.Wk, self.bk).reshape(B, S, D)
            value = linear(v.reshape(B * S, D), self.Wv, self.bv).reshape(B, S, D)

        # Faithful scaling: reference uses query.shape[0] AFTER the transpose,
        # which is the batch size B (not d_k).
        scale = 1.0 / math.sqrt(B)

        # Flash attention with head split/merge fused into the BlockSpecs.
        x = mha_attention(query, key_, value, scale, self.h, self.d_k)  # (B, S, D)

        # Output projection (dropout p=0.0 -> identity).
        return linear(x.reshape(B * S, D), self.Wo, self.bo).reshape(B, S, D)


# -------------------------------- reference ----------------------------------

def _reference(mha, q, k, v):
    B, S, D = q.shape
    h, dk = mha.h, mha.d_k
    query = q.reshape(B * S, D) @ mha.Wq + mha.bq
    key_ = k.reshape(B * S, D) @ mha.Wk + mha.bk
    value = v.reshape(B * S, D) @ mha.Wv + mha.bv

    def split(x):
        return x.reshape(B, S, h, dk).transpose(0, 2, 1, 3)

    qh = split(query.reshape(B, S, D))
    kh = split(key_.reshape(B, S, D))
    vh = split(value.reshape(B, S, D))
    scale = 1.0 / math.sqrt(B)
    s = jnp.einsum("bhqd,bhkd->bhqk", qh, kh) * scale
    p = jax.nn.softmax(s, axis=-1)
    x = jnp.einsum("bhqk,bhkd->bhqd", p, vh)
    x = x.transpose(0, 2, 1, 3).reshape(B, S, D)
    return (x.reshape(B * S, D) @ mha.Wo + mha.bo).reshape(B, S, D)


if __name__ == "__main__":
    B, S, d_model, h = 2, 8, 32, 4
    root = jax.random.PRNGKey(0)
    kq, kk, kv_, kp = jax.random.split(root, 4)

    q = jax.random.normal(kq, (B, S, d_model), jnp.float32)
    k = jax.random.normal(kk, (B, S, d_model), jnp.float32)
    v = jax.random.normal(kv_, (B, S, d_model), jnp.float32)
    mask = jnp.ones((B, 1, S, S), jnp.float32)  # ignored (faithful to reference)

    mha = MultiHeadAttentionPallas(d_model=d_model, h=h, dropout=0.0, key=kp)

    # Cross-attention path (separate projections).
    out = mha(q, k, v, mask)
    jax.block_until_ready(out)
    ref = _reference(mha, q, k, v)
    assert out.shape == (B, S, d_model)
    # Tolerance accounts for the EUP approx-reciprocal softmax normalization.
    assert jnp.allclose(out, ref, atol=2e-3, rtol=2e-3), "mismatch vs JAX reference"

    # Self-attention path (exercises the fused QKV projection).
    out_sa = mha(q, q, q, mask)
    jax.block_until_ready(out_sa)
    ref_sa = _reference(mha, q, q, q)
    assert jnp.allclose(out_sa, ref_sa, atol=2e-3, rtol=2e-3), "mismatch (self-attn path)"

    print("KERNEL_OK")
</pallas_src>

<mosaic_0001>
module attributes {stable_mosaic.version = 11 : i64} {
  func.func @_linear_kernel(%arg0: i32, %arg1: i32, %arg2: i32, %arg3: memref<16x32xf32, #tpu.memory_space<vmem>>, %arg4: memref<32x32xf32, #tpu.memory_space<vmem>>, %arg5: memref<1x32xf32, #tpu.memory_space<vmem>>, %arg6: memref<16x32xf32, #tpu.memory_space<vmem>>, %arg7: memref<16x32xf32, #tpu.memory_space<vmem>>) attributes {dimension_semantics = [#tpu.dimension_semantics<parallel>, #tpu.dimension_semantics<parallel>, #tpu.dimension_semantics<arbitrary>], iteration_bounds = array<i64: 1, 1, 1>, scalar_prefetch = 0 : i64, scratch_operands = 1 : i64, tpu.core_type = #tpu.core_type<tc>, window_params = [{transform_indices = @transform_0, window_bounds = array<i64: 16, 32>}, {transform_indices = @transform_1, window_bounds = array<i64: 32, 32>}, {transform_indices = @transform_2, window_bounds = array<i64: 1, 32>}, {transform_indices = @transform_3, window_bounds = array<i64: 16, 32>}]} {
    %c0_i32 = arith.constant 0 : i32
    %0 = arith.cmpi eq, %arg2, %c0_i32 : i32
    %1 = arith.extui %0 : i1 to i32
    %c0_i32_0 = arith.constant 0 : i32
    %2 = arith.cmpi ne, %1, %c0_i32_0 : i32
    scf.if %2 {
      %cst_10 = arith.constant 0.000000e+00 : f32
      %12 = vector.broadcast %cst_10 : f32 to vector<16x32xf32>
      %c0_11 = arith.constant 0 : index
      %c0_12 = arith.constant 0 : index
      %13 = vector.load %arg7[%c0_11, %c0_12] : memref<16x32xf32, #tpu.memory_space<vmem>>, vector<16x32xf32>
      tpu.vector_store %arg7[%c0_11, %c0_12], %12 {strides = array<i32>} : memref<16x32xf32, #tpu.memory_space<vmem>>, vector<16x32xf32>,
    } else {
    }
    %c0 = arith.constant 0 : index
    %c0_1 = arith.constant 0 : index
    %3 = vector.load %arg7[%c0, %c0_1] : memref<16x32xf32, #tpu.memory_space<vmem>>, vector<16x32xf32>
    %c0_2 = arith.constant 0 : index
    %c0_3 = arith.constant 0 : index
    %4 = vector.load %arg3[%c0_2, %c0_3] : memref<16x32xf32, #tpu.memory_space<vmem>>, vector<16x32xf32>
    %c0_4 = arith.constant 0 : index
    %c0_5 = arith.constant 0 : index
    %5 = vector.load %arg4[%c0_4, %c0_5] : memref<32x32xf32, #tpu.memory_space<vmem>>, vector<32x32xf32>
    %cst = arith.constant dense<0.000000e+00> : vector<16x32xf32>
    %6 = tpu.matmul %4, %5, %cst {dimension_numbers = #tpu.dot_dimension_numbers<[1], [0], [0], [1], [0, 0, 1, 1], [], []>} : vector<16x32xf32>, vector<32x32xf32>, vector<16x32xf32> -> vector<16x32xf32>
    %7 = arith.addf %3, %6 : vector<16x32xf32>
    %c0_6 = arith.constant 0 : index
    %c0_7 = arith.constant 0 : index
    %8 = vector.load %arg7[%c0_6, %c0_7] : memref<16x32xf32, #tpu.memory_space<vmem>>, vector<16x32xf32>
    tpu.vector_store %arg7[%c0_6, %c0_7], %7 {strides = array<i32>} : memref<16x32xf32, #tpu.memory_space<vmem>>, vector<16x32xf32>,
    %c0_i32_8 = arith.constant 0 : i32
    %9 = arith.cmpi eq, %arg2, %c0_i32_8 : i32
    %10 = arith.extui %9 : i1 to i32
    %c0_i32_9 = arith.constant 0 : i32
    %11 = arith.cmpi ne, %10, %c0_i32_9 : i32
    scf.if %11 {
      %c0_10 = arith.constant 0 : index
      %c0_11 = arith.constant 0 : index
      %12 = vector.load %arg7[%c0_10, %c0_11] : memref<16x32xf32, #tpu.memory_space<vmem>>, vector<16x32xf32>
      %c0_12 = arith.constant 0 : index
      %c0_13 = arith.constant 0 : index
      %13 = vector.load %arg5[%c0_12, %c0_13] : memref<1x32xf32, #tpu.memory_space<vmem>>, vector<1x32xf32>
      %14 = vector.broadcast %13 : vector<1x32xf32> to vector<16x32xf32>
      %15 = arith.addf %12, %14 : vector<16x32xf32>
      %c0_14 = arith.constant 0 : index
      %c0_15 = arith.constant 0 : index
      %16 = vector.load %arg6[%c0_14, %c0_15] : memref<16x32xf32, #tpu.memory_space<vmem>>, vector<16x32xf32>
      tpu.vector_store %arg6[%c0_14, %c0_15], %15 {strides = array<i32>} : memref<16x32xf32, #tpu.memory_space<vmem>>, vector<16x32xf32>,
    } else {
    }
    return
  }
  func.func @transform_0(%arg0: i32, %arg1: i32, %arg2: i32) -> (i32, i32) {
    %c0_i32 = arith.constant 0 : i32
    return %arg0, %arg2 : i32, i32
  }
  func.func @transform_1(%arg0: i32, %arg1: i32, %arg2: i32) -> (i32, i32) {
    %c0_i32 = arith.constant 0 : i32
    return %arg2, %arg1 : i32, i32
  }
  func.func @transform_2(%arg0: i32, %arg1: i32, %arg2: i32) -> (i32, i32) {
    %c0_i32 = arith.constant 0 : i32
    %c0_i32_0 = arith.constant 0 : i32
    return %c0_i32, %arg1 : i32, i32
  }
  func.func @transform_3(%arg0: i32, %arg1: i32, %arg2: i32) -> (i32, i32) {
    %c0_i32 = arith.constant 0 : i32
    return %arg0, %arg1 : i32, i32
  }
}

</mosaic_0001>

<llo_original>
// kernel: tpu_custom_call.1
$region0: #{tpu_custom_call.1}
  #allocation0 [shape = 'u32[]', space=smem, size = 0x4, offset = 0x4, fixed_abs, tag = 'smem constant byte address 0x4 - core index']
  #allocation1 [shape = 'u32[72,128]{1,0:T(1,128)}', space=vmem, size = 0x9000, scoped, tag = 'internal scratch']
  #allocation2 [shape = 'f32[16,32]{1,0:T(8,128)}', space=vmem, size = 0x2000, scoped, tag = 'scratch operand']
  %s0 = inlined_call_operand.hbm [shape: f32[16,32], index: 0, kind: input, shape index: {}]
  %s1 = inlined_call_operand.hbm [shape: f32[32,32], index: 1, kind: input, shape index: {}]
  %s2 = inlined_call_operand.vmem [shape: f32[1,32], index: 2, kind: input, shape index: {}]
  %s3 = inlined_call_operand.hbm [shape: f32[16,32], index: 3, kind: output, shape index: {}]
  %s4 = sld [smem:[#allocation0]]
  $region38: #{tpu_custom_call.1} parent=0
    _
  %s6 = ssub.s32 1, %s4
  %s7 = scalar_select 0, %s6, %s4
  $region1: #{tpu_custom_call.1} parent=0
    #allocation3 [shape = 'u8[8192]{0}', space=vmem, size = 0x2000, scoped, tag = 'input window, operand 0, single buffered']
    #allocation4 [shape = 's32[1]{0}', space=sflag, size = 0x4, scoped, tag = 'scoped memory for tpu_custom_call.1']
    #allocation5 [shape = 's32[1]{0}', space=sflag, size = 0x4, scoped, tag = 'scoped memory for tpu_custom_call.1']
    #allocation6 [shape = 'u8[16384]{0}', space=vmem, size = 0x4000, scoped, tag = 'input window, operand 1, single buffered']
    #allocation7 [shape = 's32[1]{0}', space=sflag, size = 0x4, scoped, tag = 'scoped memory for tpu_custom_call.1']
    #allocation8 [shape = 'u8[8192]{0}', space=vmem, size = 0x2000, scoped, tag = 'output window, operand 0, single buffered']
    %8 = vsyncpa [#allocation4], 0
    %9 = vsyncpa [#allocation7], 0
    %10 = vsyncpa [#allocation5], 0
    // Predicated region
    $region2: #{tpu_custom_call.1} parent=1 // pred_check
      _
    $region3: #{tpu_custom_call.1} parent=1 // pred_check_branch
      %12 = sbr.rel (0) target = $region5
    $region4: #{tpu_custom_call.1} parent=1 // pred_region
      %14 = vsyncadd [#allocation4], 0
      %s15 = sshll.u32 %s0, 4
      %s16 = int_to_ptr.hbm [resolvable:$true] %s15
      %s17 = sshll.u32 [#allocation3], 4
      %s18 = int_to_ptr.vmem [resolvable:$true] %s17
      %23 = dma.hbm_to_vmem [thread:$0]  %s16, 256, %s18, [#allocation4], 128, 128, 8
    $region5: #{tpu_custom_call.1} parent=1 // pred_fallthru
      _
    // Predicated region
    $region6: #{tpu_custom_call.1} parent=1 // pred_check
      _
    $region7: #{tpu_custom_call.1} parent=1 // pred_check_branch
      %25 = sbr.rel (0) target = $region9
    $region8: #{tpu_custom_call.1} parent=1 // pred_region
      %27 = vsyncadd [#allocation7], 0
      %s28 = sshll.u32 %s1, 4
      %s29 = int_to_ptr.hbm [resolvable:$true] %s28
      %s30 = sshll.u32 [#allocation6], 4
      %s31 = int_to_ptr.vmem [resolvable:$true] %s30
      %36 = dma.hbm_to_vmem [thread:$0]  %s29, 512, %s31, [#allocation7], 128, 128, 8
    $region9: #{tpu_custom_call.1} parent=1 // pred_fallthru
      _
    // Predicated region
    $region10: #{tpu_custom_call.1} parent=1 // pred_check
      _
    $region11: #{tpu_custom_call.1} parent=1 // pred_check_branch
      %38 = sbr.rel (0) target = $region13
    $region12: #{tpu_custom_call.1} parent=1 // pred_region
      _
    $region13: #{tpu_custom_call.1} parent=1 // pred_fallthru
      _
    // Predicated region
    $region14: #{tpu_custom_call.1} parent=1 // pred_check
      _
    $region15: #{tpu_custom_call.1} parent=1 // pred_check_branch
      %40 = sbr.rel (0) target = $region17
    $region16: #{tpu_custom_call.1} parent=1 // pred_region
      %42 = dma.done [#allocation4], 256
    $region17: #{tpu_custom_call.1} parent=1 // pred_fallthru
      _
    // Predicated region
    $region18: #{tpu_custom_call.1} parent=1 // pred_check
      _
    $region19: #{tpu_custom_call.1} parent=1 // pred_check_branch
      %44 = sbr.rel (0) target = $region21
    $region20: #{tpu_custom_call.1} parent=1 // pred_region
      %46 = dma.done [#allocation7], 512
    $region21: #{tpu_custom_call.1} parent=1 // pred_fallthru
      _
    %p47 = scmp.eq.s32.totalorder 0, 0
    // Predicated region
    $region22: #{tpu_custom_call.1} parent=1 // pred_check
      %p48 = pneg %p47
    $region23: #{tpu_custom_call.1} parent=1 // pred_check_branch
      %50 = sbr.rel (%p48) target = $region25
    $region24: #{tpu_custom_call.1} parent=1 // pred_region
      %vm51 = vcmask 261120
      %52 = vst.msk [vmem:[#allocation2] sm:$0xff] %vm51, 0.0
      %53 = vst.msk [vmem:[#allocation2 + $0x8] sm:$0xff] %vm51, 0.0
    $region25: #{tpu_custom_call.1} parent=1 // pred_fallthru
      _
    %v54 = vld [vmem:[#allocation2] sm:$0xff]
    %v55 = vld [vmem:[#allocation2 + $0x8] sm:$0xff]
    %v56 = vld [vmem:[#allocation3] sm:$0xff]
    %v57 = vld [vmem:[#allocation3 + $0x8] sm:$0xff]
    %v58 = vld [vmem:[#allocation6] sm:$0xff]
    %v59 = vld [vmem:[#allocation6 + $0x8] sm:$0xff]
    %v60 = vld [vmem:[#allocation6 + $0x10] sm:$0xff]
    %v61 = vld [vmem:[#allocation6 + $0x18] sm:$0xff]
    %vm62 = vcmask 261120
    %v64 = vsel %vm62, %v56, 0
    %v67 = vsel %vm62, %v57, 0
    %69 = vmatpush.msra.mxu0 0.0
    %70 = vmatpush.msra.mxu0 0.0
    %71 = vmatpush.msra.mxu0 0.0
    %72 = vmatpush.msra.mxu0 0.0
    %73 = vmatpush.msra.mxu0 0.0
    %74 = vmatpush.msra.mxu0 0.0
    %75 = vmatpush.msra.mxu0 0.0
    %76 = vmatpush.msra.mxu0 0.0
    %77 = vmatpush.msra.mxu0 0.0
    %78 = vmatpush.msra.mxu0 0.0
    %79 = vmatpush.msra.mxu0 0.0
    %80 = vmatpush.msra.mxu0 0.0
    %81 = vmatpush.msra.mxu0 %v61
    %82 = vmatpush.msra.mxu0 %v60
    %83 = vmatpush.msra.mxu0 %v59
    %84 = vmatpush.msra.mxu0 %v58
    %85 = vmatmul.f32.gmra.mxu0 %v64
    %v86 = vpop.f32.mrf.mxu0
    %v87 = vadd.f32 0.0, %v86
    %88 = vmatmul.f32.gmra.mxu0 %v67
    %v89 = vpop.f32.mrf.mxu0
    %v90 = vadd.f32 0.0, %v89
    %91 = vdwg.mxu0
    %v92 = vadd.f32 %v54, %v87
    %v93 = vadd.f32 %v55, %v90
    %94 = vst.msk [vmem:[#allocation2] sm:$0xff] %vm62, %v92
    %95 = vst.msk [vmem:[#allocation2 + $0x8] sm:$0xff] %vm62, %v93
    // Predicated region
    $region26: #{tpu_custom_call.1} parent=1 // pred_check
      %p96 = pneg %p47
    $region27: #{tpu_custom_call.1} parent=1 // pred_check_branch
      %98 = sbr.rel (%p96) target = $region29
    $region28: #{tpu_custom_call.1} parent=1 // pred_region
      %v99 = vld [vmem:[#allocation2] sm:$0xff]
      %v100 = vld [vmem:[#allocation2 + $0x8] sm:$0xff]
      %v101 = vld [vmem:[%s2] sm:$0x1]
      %v103 = vperm.slane %v101, 0
      %v105 = vadd.f32 %v99, %v103
      %v106 = vadd.f32 %v100, %v103
      %107 = vst.msk [vmem:[#allocation8] sm:$0xff] %vm62, %v105
      %108 = vst.msk [vmem:[#allocation8 + $0x8] sm:$0xff] %vm62, %v106
    $region29: #{tpu_custom_call.1} parent=1 // pred_fallthru
      _
    // Predicated region
    $region30: #{tpu_custom_call.1} parent=1 // pred_check
      _
    $region31: #{tpu_custom_call.1} parent=1 // pred_check_branch
      %110 = sbr.rel (0) target = $region33
    $region32: #{tpu_custom_call.1} parent=1 // pred_region
      %112 = vsyncadd [#allocation5], 0
      %s113 = sshll.u32 [#allocation8], 4
      %s114 = int_to_ptr.vmem [resolvable:$true] %s113
      %s115 = sshll.u32 %s3, 4
      %s116 = int_to_ptr.hbm [resolvable:$true] %s115
      %121 = dma.vmem_to_hbm [thread:$0]  %s114, 256, %s116, [#allocation5], 128, 128, 8
    $region33: #{tpu_custom_call.1} parent=1 // pred_fallthru
      _
    // Predicated region
    $region34: #{tpu_custom_call.1} parent=1 // pred_check
      _
    $region35: #{tpu_custom_call.1} parent=1 // pred_check_branch
      %123 = sbr.rel (0) target = $region37
    $region36: #{tpu_custom_call.1} parent=1 // pred_region
      %125 = dma.done [#allocation5], 256
    $region37: #{tpu_custom_call.1} parent=1 // pred_fallthru
      _
    %126 = vsyncpa [#allocation4], 1
    %127 = vsyncpa [#allocation7], 1
    %128 = vsyncpa [#allocation5], 1

</llo_original>
